<compile_context>
chip_gen: v7x
topology: tpu7x:2x2x1
jax: 0.10.0
libtpu: 0.0.40
codegen_flags: <defaults>
</compile_context>

<pallas_src>
import functools

import jax
import jax.numpy as jnp
from jax.experimental import pallas as pl
from jax.experimental.pallas import tpu as pltpu


def _se_kernel(x_ref, w1_ref, b1_ref, w2_ref, b2_ref, o_ref, *, inv_hw):
    # x_ref: (nb, C, HW) f32
    x = x_ref[...]

    # squeeze: global average pool over the spatial (lane) axis.
    f = jnp.sum(x, axis=-1, keepdims=True) * inv_hw                      # (nb, C, 1)

    # excitation on the VPU (Cr is tiny; keep the MXU out of it).
    # fc1: reduce over C (sublane axis)  -> (nb, 1, Cr)
    h = jnp.sum(f * w1_ref[...], axis=1, keepdims=True) + b1_ref[...]
    h = jnp.maximum(h, 0.0)
    # fc2: reduce over Cr (lane axis)    -> (nb, C, 1)
    s = jnp.sum(h * w2_ref[...], axis=-1, keepdims=True) + b2_ref[...]
    s = jax.nn.sigmoid(s)

    # scale: gate already laid out as (nb, C, 1) -> pure lane broadcast.
    o_ref[...] = x * s


def se_block(x_nchw, w1, b1, w2, b2, *, target_block_bytes=2 * 1024 * 1024):
    """SEBlock forward.

    x_nchw : (N, C, H, W) float32
    w1     : (Cr, C)  -- PyTorch nn.Linear(C, Cr).weight layout
    b1     : (Cr,)
    w2     : (C, Cr)  -- PyTorch nn.Linear(Cr, C).weight layout
    b2     : (C,)
    """
    N, C, H, W = x_nchw.shape
    Cr = w1.shape[0]
    HW = H * W

    # Free reshape (row-major contiguous): spatial axis becomes the lane axis.
    x_flat = x_nchw.reshape(N, C, HW)

    # weights in (C, Cr) orientation; biases shaped for in-kernel broadcast.
    w1_t = w1.T                              # (C, Cr)
    b1_r = b1.reshape(1, Cr)
    w2_r = w2                                # (C, Cr) already
    b2_r = b2.reshape(C, 1)

    # batch rows per block: largest block under the budget so the ~4 live
    # buffers (double-buffered in + out) stay well within scoped VMEM.
    bytes_per_row = C * HW * x_flat.dtype.itemsize
    nb = int(max(1, min(N, target_block_bytes // max(1, bytes_per_row))))
    grid = (pl.cdiv(N, nb),)

    kernel = functools.partial(_se_kernel, inv_hw=1.0 / HW)
    const2d = lambda b: (0, 0)               # weights stay resident across grid

    out = pl.pallas_call(
        kernel,
        out_shape=jax.ShapeDtypeStruct((N, C, HW), x_flat.dtype),
        grid=grid,
        in_specs=[
            pl.BlockSpec((nb, C, HW), lambda b: (b, 0, 0)),
            pl.BlockSpec((C, Cr), const2d),
            pl.BlockSpec((1, Cr), const2d),
            pl.BlockSpec((C, Cr), const2d),
            pl.BlockSpec((C, 1), const2d),
        ],
        out_specs=pl.BlockSpec((nb, C, HW), lambda b: (b, 0, 0)),
        compiler_params=pltpu.CompilerParams(
            dimension_semantics=("parallel",),
            vmem_limit_bytes=32 * 1024 * 1024,
        ),
    )(x_flat, w1_t, b1_r, w2_r, b2_r)

    return out.reshape(N, C, H, W)


def _reference(x, w1, b1, w2, b2):
    f = jnp.mean(x, axis=(2, 3))                 # (N, C)
    f = jnp.maximum(f @ w1.T + b1, 0.0)
    f = jax.nn.sigmoid(f @ w2.T + b2)
    return x * f[:, :, None, None]


def _run_case(key, N, C, H, W, r):
    Cr = max(1, C // r)
    kx, k1, k2, k3, k4 = jax.random.split(key, 5)
    x = jax.random.normal(kx, (N, C, H, W), dtype=jnp.float32)
    w1 = jax.random.normal(k1, (Cr, C), dtype=jnp.float32) * 0.1
    b1 = jax.random.normal(k2, (Cr,), dtype=jnp.float32) * 0.1
    w2 = jax.random.normal(k3, (C, Cr), dtype=jnp.float32) * 0.1
    b2 = jax.random.normal(k4, (C,), dtype=jnp.float32) * 0.1

    y = jax.block_until_ready(se_block(x, w1, b1, w2, b2))
    y_ref = _reference(x, w1, b1, w2, b2)
    assert jnp.allclose(y, y_ref, atol=1e-5, rtol=1e-5), \
        f"mismatch vs reference for shape {(N, C, H, W)}"


if __name__ == "__main__":
    key = jax.random.PRNGKey(0)
    k_a, k_b, k_c = jax.random.split(key, 3)

    # SEBlock(C=32, r=16): HW = 256 (lane-dense last dim)
    _run_case(k_a, N=2, C=32, H=16, W=16, r=16)
    # ragged spatial size (7x7 = 49) exercises the non-128-aligned lane path
    _run_case(k_b, N=2, C=32, H=7, W=7, r=16)
    # slightly larger channel count / spatial size
    _run_case(k_c, N=3, C=64, H=14, W=14, r=16)

    print("KERNEL_OK")
</pallas_src>

<mosaic_0001>
module attributes {stable_mosaic.version = 11 : i64} {
  func.func @_se_kernel(%arg0: i32, %arg1: memref<2x32x256xf32, #tpu.memory_space<vmem>>, %arg2: memref<32x2xf32, #tpu.memory_space<vmem>>, %arg3: memref<1x2xf32, #tpu.memory_space<vmem>>, %arg4: memref<32x2xf32, #tpu.memory_space<vmem>>, %arg5: memref<32x1xf32, #tpu.memory_space<vmem>>, %arg6: memref<2x32x256xf32, #tpu.memory_space<vmem>>) attributes {dimension_semantics = [#tpu.dimension_semantics<parallel>], iteration_bounds = array<i64: 1>, scalar_prefetch = 0 : i64, scratch_operands = 0 : i64, tpu.core_type = #tpu.core_type<tc>, window_params = [{transform_indices = @transform_0, window_bounds = array<i64: 2, 32, 256>}, {pipeline_mode = #tpu.pipeline_mode<synchronous>, transform_indices = @transform_1, window_bounds = array<i64: 32, 2>}, {pipeline_mode = #tpu.pipeline_mode<synchronous>, transform_indices = @transform_2, window_bounds = array<i64: 1, 2>}, {pipeline_mode = #tpu.pipeline_mode<synchronous>, transform_indices = @transform_3, window_bounds = array<i64: 32, 2>}, {pipeline_mode = #tpu.pipeline_mode<synchronous>, transform_indices = @transform_4, window_bounds = array<i64: 32, 1>}, {transform_indices = @transform_5, window_bounds = array<i64: 2, 32, 256>}]} {
    %c0 = arith.constant 0 : index
    %c0_0 = arith.constant 0 : index
    %c0_1 = arith.constant 0 : index
    %0 = vector.load %arg1[%c0, %c0_0, %c0_1] : memref<2x32x256xf32, #tpu.memory_space<vmem>>, vector<2x32x256xf32>
    %cst = arith.constant dense<0.000000e+00> : vector<2x32xf32>
    %1 = vector.multi_reduction <add>, %0, %cst [2] : vector<2x32x256xf32> to vector<2x32xf32>
    %2 = vector.shape_cast %1 : vector<2x32xf32> to vector<2x32x1xf32>
    %cst_2 = arith.constant 3.906250e-03 : f32
    %3 = vector.broadcast %cst_2 : f32 to vector<2x32x1xf32>
    %4 = arith.mulf %2, %3 : vector<2x32x1xf32>
    %c0_3 = arith.constant 0 : index
    %c0_4 = arith.constant 0 : index
    %5 = vector.load %arg2[%c0_3, %c0_4] : memref<32x2xf32, #tpu.memory_space<vmem>>, vector<32x2xf32>
    %6 = vector.shape_cast %5 : vector<32x2xf32> to vector<1x32x2xf32>
    %7 = vector.broadcast %4 : vector<2x32x1xf32> to vector<2x32x2xf32>
    %8 = vector.broadcast %6 : vector<1x32x2xf32> to vector<2x32x2xf32>
    %9 = arith.mulf %7, %8 : vector<2x32x2xf32>
    %cst_5 = arith.constant dense<0.000000e+00> : vector<2x2xf32>
    %10 = vector.multi_reduction <add>, %9, %cst_5 [1] : vector<2x32x2xf32> to vector<2x2xf32>
    %11 = vector.shape_cast %10 : vector<2x2xf32> to vector<2x1x2xf32>
    %c0_6 = arith.constant 0 : index
    %c0_7 = arith.constant 0 : index
    %12 = vector.load %arg3[%c0_6, %c0_7] : memref<1x2xf32, #tpu.memory_space<vmem>>, vector<1x2xf32>
    %13 = vector.shape_cast %12 : vector<1x2xf32> to vector<1x1x2xf32>
    %14 = vector.broadcast %13 : vector<1x1x2xf32> to vector<2x1x2xf32>
    %15 = arith.addf %11, %14 : vector<2x1x2xf32>
    %cst_8 = arith.constant 0.000000e+00 : f32
    %16 = vector.broadcast %cst_8 : f32 to vector<2x1x2xf32>
    %17 = arith.maximumf %15, %16 : vector<2x1x2xf32>
    %c0_9 = arith.constant 0 : index
    %c0_10 = arith.constant 0 : index
    %18 = vector.load %arg4[%c0_9, %c0_10] : memref<32x2xf32, #tpu.memory_space<vmem>>, vector<32x2xf32>
    %19 = vector.shape_cast %18 : vector<32x2xf32> to vector<1x32x2xf32>
    %20 = vector.broadcast %17 : vector<2x1x2xf32> to vector<2x32x2xf32>
    %21 = vector.broadcast %19 : vector<1x32x2xf32> to vector<2x32x2xf32>
    %22 = arith.mulf %20, %21 : vector<2x32x2xf32>
    %cst_11 = arith.constant dense<0.000000e+00> : vector<2x32xf32>
    %23 = vector.multi_reduction <add>, %22, %cst_11 [2] : vector<2x32x2xf32> to vector<2x32xf32>
    %24 = vector.shape_cast %23 : vector<2x32xf32> to vector<2x32x1xf32>
    %c0_12 = arith.constant 0 : index
    %c0_13 = arith.constant 0 : index
    %25 = vector.load %arg5[%c0_12, %c0_13] : memref<32x1xf32, #tpu.memory_space<vmem>>, vector<32x1xf32>
    %26 = vector.shape_cast %25 : vector<32x1xf32> to vector<1x32x1xf32>
    %27 = vector.broadcast %26 : vector<1x32x1xf32> to vector<2x32x1xf32>
    %28 = arith.addf %24, %27 : vector<2x32x1xf32>
    %29 = arith.negf %28 : vector<2x32x1xf32>
    %30 = math.exp %29 : vector<2x32x1xf32>
    %cst_14 = arith.constant 1.000000e+00 : f32
    %31 = vector.broadcast %cst_14 : f32 to vector<2x32x1xf32>
    %32 = arith.addf %31, %30 : vector<2x32x1xf32>
    %33 = arith.divf %31, %32 : vector<2x32x1xf32>
    %34 = vector.broadcast %33 : vector<2x32x1xf32> to vector<2x32x256xf32>
    %35 = arith.mulf %0, %34 : vector<2x32x256xf32>
    %c0_15 = arith.constant 0 : index
    %c0_16 = arith.constant 0 : index
    %c0_17 = arith.constant 0 : index
    %36 = vector.load %arg6[%c0_15, %c0_16, %c0_17] : memref<2x32x256xf32, #tpu.memory_space<vmem>>, vector<2x32x256xf32>
    tpu.vector_store %arg6[%c0_15, %c0_16, %c0_17], %35 {strides = array<i32>} : memref<2x32x256xf32, #tpu.memory_space<vmem>>, vector<2x32x256xf32>,
    return
  }
  func.func @transform_0(%arg0: i32) -> (i32, i32, i32) {
    %c0_i32 = arith.constant 0 : i32
    %c0_i32_0 = arith.constant 0 : i32
    %c0_i32_1 = arith.constant 0 : i32
    return %arg0, %c0_i32, %c0_i32_0 : i32, i32, i32
  }
  func.func @transform_1(%arg0: i32) -> (i32, i32) {
    %c0_i32 = arith.constant 0 : i32
    %c0_i32_0 = arith.constant 0 : i32
    %c0_i32_1 = arith.constant 0 : i32
    return %c0_i32, %c0_i32_0 : i32, i32
  }
  func.func @transform_2(%arg0: i32) -> (i32, i32) {
    %c0_i32 = arith.constant 0 : i32
    %c0_i32_0 = arith.constant 0 : i32
    %c0_i32_1 = arith.constant 0 : i32
    return %c0_i32, %c0_i32_0 : i32, i32
  }
  func.func @transform_3(%arg0: i32) -> (i32, i32) {
    %c0_i32 = arith.constant 0 : i32
    %c0_i32_0 = arith.constant 0 : i32
    %c0_i32_1 = arith.constant 0 : i32
    return %c0_i32, %c0_i32_0 : i32, i32
  }
  func.func @transform_4(%arg0: i32) -> (i32, i32) {
    %c0_i32 = arith.constant 0 : i32
    %c0_i32_0 = arith.constant 0 : i32
    %c0_i32_1 = arith.constant 0 : i32
    return %c0_i32, %c0_i32_0 : i32, i32
  }
  func.func @transform_5(%arg0: i32) -> (i32, i32, i32) {
    %c0_i32 = arith.constant 0 : i32
    %c0_i32_0 = arith.constant 0 : i32
    %c0_i32_1 = arith.constant 0 : i32
    return %arg0, %c0_i32, %c0_i32_0 : i32, i32, i32
  }
}

</mosaic_0001>

<llo_original>
// kernel: tpu_custom_call.1
$region0: #{tpu_custom_call.1}
  #allocation0 [shape = 'u32[]', space=smem, size = 0x4, offset = 0x4, fixed_abs, tag = 'smem constant byte address 0x4 - core index']
  #allocation1 [shape = 'u32[144,128]{1,0:T(1,128)}', space=vmem, size = 0x12000, scoped, tag = 'internal scratch']
  %s0 = inlined_call_operand.hbm [shape: f32[2,32,256], index: 0, kind: input, shape index: {}]
  %s1 = inlined_call_operand.vmem [shape: f32[32,2], index: 1, kind: input, shape index: {}]
  %s2 = inlined_call_operand.vmem [shape: f32[1,2], index: 2, kind: input, shape index: {}]
  %s3 = inlined_call_operand.vmem [shape: f32[32,2], index: 3, kind: input, shape index: {}]
  %s4 = inlined_call_operand.vmem [shape: f32[32,1], index: 4, kind: input, shape index: {}]
  %s5 = inlined_call_operand.hbm [shape: f32[2,32,256], index: 5, kind: output, shape index: {}]
  %s6 = sld [smem:[#allocation0]]
  $region34: #{tpu_custom_call.1} parent=0
    _
  %s8 = ssub.s32 1, %s6
  %s9 = scalar_select 0, %s8, %s6
  $region1: #{tpu_custom_call.1} parent=0
    #allocation2 [shape = 'u8[65536]{0}', space=vmem, size = 0x10000, scoped, tag = 'input window, operand 0, single buffered']
    #allocation3 [shape = 's32[1]{0}', space=sflag, size = 0x4, scoped, tag = 'scoped memory for tpu_custom_call.1']
    #allocation4 [shape = 's32[1]{0}', space=sflag, size = 0x4, scoped, tag = 'scoped memory for tpu_custom_call.1']
    #allocation5 [shape = 'u8[65536]{0}', space=vmem, size = 0x10000, scoped, tag = 'output window, operand 0, single buffered']
    %10 = vsyncpa [#allocation3], 0
    %11 = vsyncpa [#allocation4], 0
    // Predicated region
    $region2: #{tpu_custom_call.1} parent=1 // pred_check
      _
    $region3: #{tpu_custom_call.1} parent=1 // pred_check_branch
      %13 = sbr.rel (0) target = $region5
    $region4: #{tpu_custom_call.1} parent=1 // pred_region
      %s15 = ssub.s32 2048, 2048
      %16 = vsyncadd [#allocation3], %s15
      %s17 = sshll.u32 [#allocation2], 4
      %s18 = int_to_ptr.vmem [resolvable:$true] %s17
      %23 = dma.hbm_to_vmem [thread:$0]  %s0, 2048, %s18, [#allocation3], 256, 256, 16
    $region5: #{tpu_custom_call.1} parent=1 // pred_fallthru
      _
    // Predicated region
    $region6: #{tpu_custom_call.1} parent=1 // pred_check
      _
    $region7: #{tpu_custom_call.1} parent=1 // pred_check_branch
      %25 = sbr.rel (0) target = $region9
    $region8: #{tpu_custom_call.1} parent=1 // pred_region
      _
    $region9: #{tpu_custom_call.1} parent=1 // pred_fallthru
      _
    // Predicated region
    $region10: #{tpu_custom_call.1} parent=1 // pred_check
      _
    $region11: #{tpu_custom_call.1} parent=1 // pred_check_branch
      %27 = sbr.rel (0) target = $region13
    $region12: #{tpu_custom_call.1} parent=1 // pred_region
      _
    $region13: #{tpu_custom_call.1} parent=1 // pred_fallthru
      _
    // Predicated region
    $region14: #{tpu_custom_call.1} parent=1 // pred_check
      _
    $region15: #{tpu_custom_call.1} parent=1 // pred_check_branch
      %29 = sbr.rel (0) target = $region17
    $region16: #{tpu_custom_call.1} parent=1 // pred_region
      _
    $region17: #{tpu_custom_call.1} parent=1 // pred_fallthru
      _
    // Predicated region
    $region18: #{tpu_custom_call.1} parent=1 // pred_check
      _
    $region19: #{tpu_custom_call.1} parent=1 // pred_check_branch
      %31 = sbr.rel (0) target = $region21
    $region20: #{tpu_custom_call.1} parent=1 // pred_region
      _
    $region21: #{tpu_custom_call.1} parent=1 // pred_fallthru
      _
    // Predicated region
    $region22: #{tpu_custom_call.1} parent=1 // pred_check
      _
    $region23: #{tpu_custom_call.1} parent=1 // pred_check_branch
      %33 = sbr.rel (0) target = $region25
    $region24: #{tpu_custom_call.1} parent=1 // pred_region
      %34 = dma.done [#allocation3], 2048
    $region25: #{tpu_custom_call.1} parent=1 // pred_fallthru
      _
    %v35 = vld [vmem:[#allocation2] sm:$0xff]
    %v36 = vld [vmem:[#allocation2 + $0x8] sm:$0xff]
    %v37 = vld [vmem:[#allocation2 + $0x10] sm:$0xff]
    %v38 = vld [vmem:[#allocation2 + $0x18] sm:$0xff]
    %v39 = vld [vmem:[#allocation2 + $0x20] sm:$0xff]
    %v40 = vld [vmem:[#allocation2 + $0x28] sm:$0xff]
    %v41 = vld [vmem:[#allocation2 + $0x30] sm:$0xff]
    %v42 = vld [vmem:[#allocation2 + $0x38] sm:$0xff]
    %v43 = vld [vmem:[#allocation2 + $0x40] sm:$0xff]
    %v44 = vld [vmem:[#allocation2 + $0x48] sm:$0xff]
    %v45 = vld [vmem:[#allocation2 + $0x50] sm:$0xff]
    %v46 = vld [vmem:[#allocation2 + $0x58] sm:$0xff]
    %v47 = vld [vmem:[#allocation2 + $0x60] sm:$0xff]
    %v48 = vld [vmem:[#allocation2 + $0x68] sm:$0xff]
    %v49 = vld [vmem:[#allocation2 + $0x70] sm:$0xff]
    %v50 = vld [vmem:[#allocation2 + $0x78] sm:$0xff]
    %v51 = vadd.f32 %v35, %v36
    %52 = vadd.xlane.f32.xlu0 %v51
    %v53 = vpop.xlane.xlu0 %52
    %v54 = vadd.f32 %v37, %v38
    %55 = vadd.xlane.f32.xlu0 %v54
    %v56 = vpop.xlane.xlu0 %55
    %v57 = vadd.f32 %v39, %v40
    %58 = vadd.xlane.f32.xlu0 %v57
    %v59 = vpop.xlane.xlu0 %58
    %v60 = vadd.f32 %v41, %v42
    %61 = vadd.xlane.f32.xlu0 %v60
    %v62 = vpop.xlane.xlu0 %61
    %v63 = vadd.f32 %v43, %v44
    %64 = vadd.xlane.f32.xlu0 %v63
    %v65 = vpop.xlane.xlu0 %64
    %v66 = vadd.f32 %v45, %v46
    %67 = vadd.xlane.f32.xlu0 %v66
    %v68 = vpop.xlane.xlu0 %67
    %v69 = vadd.f32 %v47, %v48
    %70 = vadd.xlane.f32.xlu0 %v69
    %v71 = vpop.xlane.xlu0 %70
    %v72 = vadd.f32 %v49, %v50
    %73 = vadd.xlane.f32.xlu0 %v72
    %v74 = vpop.xlane.xlu0 %73
    %v75 = vmul.f32 %v53, 0.00390625
    %v76 = vmul.f32 %v56, 0.00390625
    %v77 = vmul.f32 %v59, 0.00390625
    %v78 = vmul.f32 %v62, 0.00390625
    %v79 = vmul.f32 %v65, 0.00390625
    %v80 = vmul.f32 %v68, 0.00390625
    %v81 = vmul.f32 %v71, 0.00390625
    %v82 = vmul.f32 %v74, 0.00390625
    %v83 = vld [vmem:[%s1] sm:$0xff]
    %v84 = vld [vmem:[%s1 + $0x8] sm:$0xff]
    %v85 = vld [vmem:[%s1 + $0x10] sm:$0xff]
    %v86 = vld [vmem:[%s1 + $0x18] sm:$0xff]
    %v87 = vmul.f32 %v75, %v83
    %v88 = vmul.f32 %v76, %v84
    %v89 = vmul.f32 %v77, %v85
    %v90 = vmul.f32 %v78, %v86
    %v91 = vmul.f32 %v79, %v83
    %v92 = vmul.f32 %v80, %v84
    %v93 = vmul.f32 %v81, %v85
    %v94 = vmul.f32 %v82, %v86
    %vm95 = vcmask 15360
    %v96 = vsel %vm95, %v87, 0.0
    %v97 = vsel %vm95, %v88, 0.0
    %v98 = vadd.f32 %v96, %v97
    %v99 = vsel %vm95, %v89, 0.0
    %v100 = vadd.f32 %v98, %v99
    %v101 = vsel %vm95, %v90, 0.0
    %v102 = vadd.f32 %v100, %v101
    %v103 = vrot.slane %v102, 4
    %v104 = vadd.f32 %v102, %v103
    %v105 = vrot.slane %v104, 2
    %v106 = vadd.f32 %v104, %v105
    %v107 = vrot.slane %v106, 1
    %v108 = vadd.f32 %v106, %v107
    %v109 = vsel %vm95, %v91, 0.0
    %v110 = vsel %vm95, %v92, 0.0
    %v111 = vadd.f32 %v109, %v110
    %v112 = vsel %vm95, %v93, 0.0
    %v113 = vadd.f32 %v111, %v112
    %v114 = vsel %vm95, %v94, 0.0
    %v115 = vadd.f32 %v113, %v114
    %v116 = vrot.slane %v115, 4
    %v117 = vadd.f32 %v115, %v116
    %v118 = vrot.slane %v117, 2
    %v119 = vadd.f32 %v117, %v118
    %v120 = vrot.slane %v119, 1
    %v121 = vadd.f32 %v119, %v120
    %v122 = vld [vmem:[%s2] sm:$0x1]
    %v123 = vadd.f32 %v108, %v122
    %v124 = vadd.f32 %v121, %v122
    %v125 = vmax.f32 %v123, 0.0
    %v126 = vmax.f32 %v124, 0.0
    %v127 = vld [vmem:[%s3] sm:$0xff]
    %v128 = vld [vmem:[%s3 + $0x8] sm:$0xff]
    %v129 = vld [vmem:[%s3 + $0x10] sm:$0xff]
    %v130 = vld [vmem:[%s3 + $0x18] sm:$0xff]
    %v131 = vlaneseq
    %v132 = vshrl.u32 %v131, 7
    %v133 = vsub.s32 0, %v132
    %v134 = vrot.slane %v125, %v133
    %v135 = vlaneseq
    %v136 = vshrl.u32 %v135, 7
    %v137 = vsub.s32 0, %v136
    %v138 = vrot.slane %v126, %v137
    %v139 = vmul.f32 %v134, %v127
    %v140 = vmul.f32 %v134, %v128
    %v141 = vmul.f32 %v134, %v129
    %v142 = vmul.f32 %v134, %v130
    %v143 = vmul.f32 %v138, %v127
    %v144 = vmul.f32 %v138, %v128
    %v145 = vmul.f32 %v138, %v129
    %v146 = vmul.f32 %v138, %v130
    %v147 = vsel %vm95, %v139, 0.0
    %148 = vadd.xlane.f32.xlu0 %v147
    %v149 = vpop.xlane.xlu0 %148
    %v150 = vsel %vm95, %v140, 0.0
    %151 = vadd.xlane.f32.xlu0 %v150
    %v152 = vpop.xlane.xlu0 %151
    %v153 = vsel %vm95, %v141, 0.0
    %154 = vadd.xlane.f32.xlu0 %v153
    %v155 = vpop.xlane.xlu0 %154
    %v156 = vsel %vm95, %v142, 0.0
    %157 = vadd.xlane.f32.xlu0 %v156
    %v158 = vpop.xlane.xlu0 %157
    %v159 = vsel %vm95, %v143, 0.0
    %160 = vadd.xlane.f32.xlu0 %v159
    %v161 = vpop.xlane.xlu0 %160
    %v162 = vsel %vm95, %v144, 0.0
    %163 = vadd.xlane.f32.xlu0 %v162
    %v164 = vpop.xlane.xlu0 %163
    %v165 = vsel %vm95, %v145, 0.0
    %166 = vadd.xlane.f32.xlu0 %v165
    %v167 = vpop.xlane.xlu0 %166
    %v168 = vsel %vm95, %v146, 0.0
    %169 = vadd.xlane.f32.xlu0 %v168
    %v170 = vpop.xlane.xlu0 %169
    %v171 = vld [vmem:[%s4] sm:$0xff]
    %v172 = vld [vmem:[%s4 + $0x8] sm:$0xff]
    %v173 = vld [vmem:[%s4 + $0x10] sm:$0xff]
    %v174 = vld [vmem:[%s4 + $0x18] sm:$0xff]
    %v175 = vadd.f32 %v149, %v171
    %v176 = vadd.f32 %v152, %v172
    %v177 = vadd.f32 %v155, %v173
    %v178 = vadd.f32 %v158, %v174
    %v179 = vadd.f32 %v161, %v171
    %v180 = vadd.f32 %v164, %v172
    %v181 = vadd.f32 %v167, %v173
    %v182 = vadd.f32 %v170, %v174
    %v183 = vxor.u32 %v175, 2147483648
    %v184 = vxor.u32 %v176, 2147483648
    %v185 = vxor.u32 %v177, 2147483648
    %v186 = vxor.u32 %v178, 2147483648
    %v187 = vxor.u32 %v179, 2147483648
    %v188 = vxor.u32 %v180, 2147483648
    %v189 = vxor.u32 %v181, 2147483648
    %v190 = vxor.u32 %v182, 2147483648
    %v191 = vmul.f32 %v183, 1.442695
    %v192 = vpow.pop %v191
    %v193 = vmul.f32 %v184, 1.442695
    %v194 = vpow.pop %v193
    %v195 = vmul.f32 %v185, 1.442695
    %v196 = vpow.pop %v195
    %v197 = vmul.f32 %v186, 1.442695
    %v198 = vpow.pop %v197
    %v199 = vmul.f32 %v187, 1.442695
    %v200 = vpow.pop %v199
    %v201 = vmul.f32 %v188, 1.442695
    %v202 = vpow.pop %v201
    %v203 = vmul.f32 %v189, 1.442695
    %v204 = vpow.pop %v203
    %v205 = vmul.f32 %v190, 1.442695
    %v206 = vpow.pop %v205
    %v207 = vadd.f32 %v192, 1.0
    %v208 = vadd.f32 %v194, 1.0
    %v209 = vadd.f32 %v196, 1.0
    %v210 = vadd.f32 %v198, 1.0
    %v211 = vadd.f32 %v200, 1.0
    %v212 = vadd.f32 %v202, 1.0
    %v213 = vadd.f32 %v204, 1.0
    %v214 = vadd.f32 %v206, 1.0
    %v215 = vrcp.pop %v207
    %v216 = vmul.f32 1.0, %v215
    %v217 = vrcp.pop %v208
    %v218 = vmul.f32 1.0, %v217
    %v219 = vrcp.pop %v209
    %v220 = vmul.f32 1.0, %v219
    %v221 = vrcp.pop %v210
    %v222 = vmul.f32 1.0, %v221
    %v223 = vrcp.pop %v211
    %v224 = vmul.f32 1.0, %v223
    %v225 = vrcp.pop %v212
    %v226 = vmul.f32 1.0, %v225
    %v227 = vrcp.pop %v213
    %v228 = vmul.f32 1.0, %v227
    %v229 = vrcp.pop %v214
    %v230 = vmul.f32 1.0, %v229
    %232 = vset.pattern.permute.xlu0 0
    %233 = vperm.xlu0 %232, %v216
    %v234 = vpop.permute.xlu0 %233
    %237 = vset.pattern.permute.xlu0 0
    %238 = vperm.xlu0 %237, %v218
    %v239 = vpop.permute.xlu0 %238
    %242 = vset.pattern.permute.xlu0 0
    %243 = vperm.xlu0 %242, %v220
    %v244 = vpop.permute.xlu0 %243
    %247 = vset.pattern.permute.xlu0 0
    %248 = vperm.xlu0 %247, %v222
    %v249 = vpop.permute.xlu0 %248
    %252 = vset.pattern.permute.xlu0 0
    %253 = vperm.xlu0 %252, %v224
    %v254 = vpop.permute.xlu0 %253
    %257 = vset.pattern.permute.xlu0 0
    %258 = vperm.xlu0 %257, %v226
    %v259 = vpop.permute.xlu0 %258
    %262 = vset.pattern.permute.xlu0 0
    %263 = vperm.xlu0 %262, %v228
    %v264 = vpop.permute.xlu0 %263
    %267 = vset.pattern.permute.xlu0 0
    %268 = vperm.xlu0 %267, %v230
    %v269 = vpop.permute.xlu0 %268
    %v271 = vmul.f32 %v35, %v234
    %v272 = vmul.f32 %v36, %v234
    %v273 = vmul.f32 %v37, %v239
    %v274 = vmul.f32 %v38, %v239
    %v275 = vmul.f32 %v39, %v244
    %v276 = vmul.f32 %v40, %v244
    %v277 = vmul.f32 %v41, %v249
    %v278 = vmul.f32 %v42, %v249
    %v279 = vmul.f32 %v43, %v254
    %v280 = vmul.f32 %v44, %v254
    %v281 = vmul.f32 %v45, %v259
    %v282 = vmul.f32 %v46, %v259
    %v283 = vmul.f32 %v47, %v264
    %v284 = vmul.f32 %v48, %v264
    %v285 = vmul.f32 %v49, %v269
    %v286 = vmul.f32 %v50, %v269
    %287 = vst [vmem:[#allocation5] sm:$0xff] %v271
    %288 = vst [vmem:[#allocation5 + $0x8] sm:$0xff] %v272
    %289 = vst [vmem:[#allocation5 + $0x10] sm:$0xff] %v273
    %290 = vst [vmem:[#allocation5 + $0x18] sm:$0xff] %v274
    %291 = vst [vmem:[#allocation5 + $0x20] sm:$0xff] %v275
    %292 = vst [vmem:[#allocation5 + $0x28] sm:$0xff] %v276
    %293 = vst [vmem:[#allocation5 + $0x30] sm:$0xff] %v277
    %294 = vst [vmem:[#allocation5 + $0x38] sm:$0xff] %v278
    %295 = vst [vmem:[#allocation5 + $0x40] sm:$0xff] %v279
    %296 = vst [vmem:[#allocation5 + $0x48] sm:$0xff] %v280
    %297 = vst [vmem:[#allocation5 + $0x50] sm:$0xff] %v281
    %298 = vst [vmem:[#allocation5 + $0x58] sm:$0xff] %v282
    %299 = vst [vmem:[#allocation5 + $0x60] sm:$0xff] %v283
    %300 = vst [vmem:[#allocation5 + $0x68] sm:$0xff] %v284
    %301 = vst [vmem:[#allocation5 + $0x70] sm:$0xff] %v285
    %302 = vst [vmem:[#allocation5 + $0x78] sm:$0xff] %v286
    // Predicated region
    $region26: #{tpu_custom_call.1} parent=1 // pred_check
      _
    $region27: #{tpu_custom_call.1} parent=1 // pred_check_branch
      %304 = sbr.rel (0) target = $region29
    $region28: #{tpu_custom_call.1} parent=1 // pred_region
      %s306 = ssub.s32 2048, 2048
      %307 = vsyncadd [#allocation4], %s306
      %s308 = sshll.u32 [#allocation5], 4
      %s309 = int_to_ptr.vmem [resolvable:$true] %s308
      %314 = dma.vmem_to_hbm [thread:$0]  %s309, 2048, %s5, [#allocation4], 256, 256, 16
    $region29: #{tpu_custom_call.1} parent=1 // pred_fallthru
      _
    // Predicated region
    $region30: #{tpu_custom_call.1} parent=1 // pred_check
      _
    $region31: #{tpu_custom_call.1} parent=1 // pred_check_branch
      %316 = sbr.rel (0) target = $region33
    $region32: #{tpu_custom_call.1} parent=1 // pred_region
      %317 = dma.done [#allocation4], 2048
    $region33: #{tpu_custom_call.1} parent=1 // pred_fallthru
      _
    %318 = vsyncpa [#allocation3], 1
    %319 = vsyncpa [#allocation4], 1

</llo_original>
